<compile_context>
chip_gen: v5e
topology: v5e:2x2
jax: 0.10.0
libtpu: 0.0.40
codegen_flags: <defaults>
</compile_context>

<pallas_src>
import functools
import numpy as np
import jax
import jax.numpy as jnp
from jax.experimental import pallas as pl
from jax.experimental.pallas import tpu as pltpu

EPS = 1e-5


# ----------------------------------------------------------------------------- kernel
def _ups_bottleneck_kernel(x_ref, code_ref,
                           w01_ref, b01_ref,     # fused [main 1x1 | ext conv1 1x1], transposed
                           wt_ref, bt_ref,       # fused 2x2 tconv, transposed (4*Cint, Cint)
                           we2_ref, b2_ref,      # block-diag ext conv2, transposed
                           out_ref, *, cout):
    """All operands are channel-major: (channels, pixels). Pixels live on the lane axis."""
    x = x_ref[...]                                                       # (Cin, t) bf16

    # fused main + ext1 1x1 convs: one MXU push, split on the sublane (channel) axis
    y01 = jnp.dot(w01_ref[...], x, preferred_element_type=jnp.float32) + b01_ref[...]
    main = y01[:cout, :]                                                 # (Cout, t) f32 (no ReLU)
    ext1 = jnp.maximum(y01[cout:, :], 0.0)                               # (Cint, t) f32

    # fused 2x2 transposed conv: 4 sub-position matmuls stacked on the channel axis
    extt = jnp.maximum(
        jnp.dot(wt_ref[...], ext1.astype(jnp.bfloat16),
                preferred_element_type=jnp.float32) + bt_ref[...], 0.0)  # (4*Cint, t)

    # fused ext conv2 via block-diagonal weights
    ext2 = jnp.maximum(
        jnp.dot(we2_ref[...], extt.astype(jnp.bfloat16),
                preferred_element_type=jnp.float32) + b2_ref[...], 0.0)  # (4*Cout, t)

    # MaxUnpool2d(k=2): precomputed code in {0,1,2,3} = 2*kh+kw selects which of the 4
    # output sub-positions receives `main` for each (channel, pixel).
    code = code_ref[...].astype(jnp.int32)                               # (Cout, t)
    unpooled = jnp.concatenate(
        [jnp.where(code == k, main, 0.0) for k in range(4)], axis=0)     # (4*Cout, t)

    out_ref[...] = jnp.maximum(unpooled + ext2, 0.0).astype(out_ref.dtype)


# ----------------------------------------------------------------------------- tiling
def _two_tensorcore_chip():
    try:
        kind = jax.devices()[0].device_kind.lower()
    except Exception:
        return False
    return "v7" in kind          # v7x-class: 2 TensorCores share the parallel grid axes


def _choose_pixel_tile(hw, n_batch, cap=2048):
    """Largest 128-multiple divisor of hw (<= cap); whole plane if none exists."""
    cands = [d for d in range(128, min(hw, cap) + 1, 128) if hw % d == 0]
    if not cands:
        return hw
    if _two_tensorcore_chip() and n_batch % 2 == 1:
        even = [d for d in cands if (hw // d) % 2 == 0]
        if even:
            return max(even)     # even total step count -> even split across the 2 cores
    return max(cands)


# ----------------------------------------------------------------------------- wrapper
def upsampling_bottleneck(x_nchw, max_indices_nchw, params, tile_cap=2048):
    """UpsamplingBottleneck forward. Returns NCHW output in bf16."""
    N, Cin, H, W = x_nchw.shape
    wm, bm, we1, b1, wt, bt, we2, b2 = (params[k] for k in
                                        ("wm", "bm", "we1", "b1", "wt", "bt", "we2", "b2"))
    Cout = wm.shape[1]
    Cint = we1.shape[1]
    HW = H * W
    t = _choose_pixel_tile(HW, N, tile_cap)

    # Channel-major inputs: NCHW needs only a reshape + bf16 cast (no transpose pass).
    x_cm = x_nchw.reshape(N, Cin, HW).astype(jnp.bfloat16)

    # Unpool sub-position code (0..3), int8: 4x smaller than raw indices and removes the
    # vector int div/mod from the kernel.  Assumes PyTorch MaxPool2d return_indices
    # convention (flat index into the (2H, 2W) plane, inside this pixel's 2x2 window).
    Wout = 2 * W
    hh = jnp.arange(H, dtype=jnp.int32)[:, None]
    ww = jnp.arange(W, dtype=jnp.int32)[None, :]
    base = (2 * hh * Wout + 2 * ww)[None, None]                          # (1,1,H,W)
    diff = max_indices_nchw.astype(jnp.int32) - base
    code_cm = (2 * (diff // Wout) + (diff % Wout)).astype(jnp.int8).reshape(N, Cout, HW)

    # Fused / transposed weights (bf16 into the MXU) and biases (f32 column vectors).
    w01_T = jnp.concatenate([wm.T, we1.T], axis=0).astype(jnp.bfloat16)        # (Cout+Cint, Cin)
    b01_T = jnp.concatenate([bm, b1], axis=1).T.astype(jnp.float32)            # (Cout+Cint, 1)
    wt_T = jnp.transpose(wt, (0, 2, 1)).reshape(4 * Cint, Cint).astype(jnp.bfloat16)
    bt_T = jnp.tile(bt, (1, 4)).T.astype(jnp.float32)                          # (4*Cint, 1)
    we2_T = jnp.kron(jnp.eye(4, dtype=we2.dtype), we2.T).astype(jnp.bfloat16)  # (4*Cout, 4*Cint)
    b2_T = jnp.tile(b2, (1, 4)).T.astype(jnp.float32)                          # (4*Cout, 1)

    kernel = functools.partial(_ups_bottleneck_kernel, cout=Cout)
    rep = lambda r, c: pl.BlockSpec((r, c), lambda n, j: (0, 0))   # replicated weights/biases

    out_cm = pl.pallas_call(
        kernel,
        out_shape=jax.ShapeDtypeStruct((N, 4 * Cout, HW), jnp.bfloat16),
        grid=(N, HW // t),
        in_specs=[
            pl.BlockSpec((None, Cin, t), lambda n, j: (n, 0, j)),
            pl.BlockSpec((None, Cout, t), lambda n, j: (n, 0, j)),
            rep(Cout + Cint, Cin), rep(Cout + Cint, 1),
            rep(4 * Cint, Cint), rep(4 * Cint, 1),
            rep(4 * Cout, 4 * Cint), rep(4 * Cout, 1),
        ],
        out_specs=pl.BlockSpec((None, 4 * Cout, t), lambda n, j: (n, 0, j)),
        compiler_params=pltpu.CompilerParams(
            dimension_semantics=("parallel", "parallel"),
            vmem_limit_bytes=32 * 1024 * 1024),
    )(x_cm, code_cm, w01_T, b01_T, wt_T, bt_T, we2_T, b2_T)

    # (N, [kh, kw, Cout], H*W) -> (N, Cout, 2H, 2W): one bf16 interleave pass.
    out = out_cm.reshape(N, 2, 2, Cout, H, W).transpose(0, 3, 4, 1, 5, 2)
    return out.reshape(N, Cout, 2 * H, 2 * W)


# ----------------------------------------------------------------------------- params
def _bn_fold(w_last_axis_out, key, c):
    k1, k2, k3, k4 = jax.random.split(key, 4)
    gamma = jax.random.uniform(k1, (c,), minval=0.5, maxval=1.5)
    beta = jax.random.normal(k2, (c,)) * 0.1
    mean = jax.random.normal(k3, (c,)) * 0.1
    var = jax.random.uniform(k4, (c,), minval=0.5, maxval=1.5)
    scale = gamma / jnp.sqrt(var + EPS)
    bias = (beta - mean * scale)[None, :]
    return w_last_axis_out * scale, bias


def init_params(key, cin, cout, cint):
    ks = jax.random.split(key, 8)
    wm_raw = jax.random.normal(ks[0], (cin, cout)) / np.sqrt(cin)
    we1_raw = jax.random.normal(ks[1], (cin, cint)) / np.sqrt(cin)
    # PyTorch ConvTranspose2d weight: (Cin, Cout, kH, kW) -> (kH*kW, Cin, Cout)
    wt_raw = (jax.random.normal(ks[2], (cint, cint, 2, 2)) / np.sqrt(cint))
    wt_raw = jnp.transpose(wt_raw, (2, 3, 0, 1)).reshape(4, cint, cint)
    we2_raw = jax.random.normal(ks[3], (cint, cout)) / np.sqrt(cint)

    wm, bm = _bn_fold(wm_raw, ks[4], cout)
    we1, b1 = _bn_fold(we1_raw, ks[5], cint)
    wt, bt = _bn_fold(wt_raw, ks[6], cint)
    we2, b2 = _bn_fold(we2_raw, ks[7], cout)
    return dict(wm=wm, bm=bm, we1=we1, b1=b1, wt=wt, bt=bt, we2=we2, b2=b2)


# ----------------------------------------------------------------------------- reference
def reference(x_nchw, idx_nchw, p):
    N, Cin, H, W = x_nchw.shape
    x = jnp.transpose(x_nchw, (0, 2, 3, 1)).astype(jnp.float32)
    main = jnp.einsum("nhwc,cd->nhwd", x, p["wm"]) + p["bm"][0]
    ext1 = jax.nn.relu(jnp.einsum("nhwc,cd->nhwd", x, p["we1"]) + p["b1"][0])
    extt = jax.nn.relu(jnp.einsum("nhwc,kcd->knhwd", ext1, p["wt"]) + p["bt"][0])
    ext2 = jax.nn.relu(jnp.einsum("knhwc,cd->knhwd", extt, p["we2"]) + p["b2"][0])
    Wout = 2 * W
    idx = jnp.transpose(idx_nchw, (0, 2, 3, 1))
    hh = jnp.arange(H)[:, None]
    ww = jnp.arange(W)[None, :]
    base = (4 * hh * W + 2 * ww)[None, :, :, None]
    outs = []
    for kh in range(2):
        for kw in range(2):
            unpool = jnp.where(idx == base + (kh * Wout + kw), main, 0.0)
            outs.append(jax.nn.relu(unpool + ext2[2 * kh + kw]))
    out = jnp.stack(outs, 0).reshape(2, 2, N, H, W, -1).transpose(2, 3, 0, 4, 1, 5)
    out = out.reshape(N, 2 * H, Wout, -1)
    return jnp.transpose(out, (0, 3, 1, 2))


# ----------------------------------------------------------------------------- main
if __name__ == "__main__":
    key = jax.random.PRNGKey(0)
    k_x, k_p, k_rh, k_rw = jax.random.split(key, 4)

    N, in_channels, H, W = 2, 16, 8, 8
    out_channels = 8
    internal = in_channels // 4           # internal_ratio = 4

    x = jax.random.normal(k_x, (N, in_channels, H, W), dtype=jnp.float32)

    # synthetic MaxPool2d(k=2, s=2, return_indices=True) indices: one position per 2x2
    # window of the (2H, 2W) unpooled plane, per (n, c_out)
    rh = jax.random.randint(k_rh, (N, out_channels, H, W), 0, 2)
    rw = jax.random.randint(k_rw, (N, out_channels, H, W), 0, 2)
    hh = jnp.arange(H)[None, None, :, None]
    ww = jnp.arange(W)[None, None, None, :]
    max_indices = ((2 * hh + rh) * (2 * W) + (2 * ww + rw)).astype(jnp.int32)

    params = init_params(k_p, in_channels, out_channels, internal)

    out = upsampling_bottleneck(x, max_indices, params)
    out = jax.block_until_ready(out)

    ref = reference(x, max_indices, params)
    # bf16 MXU operands + bf16 output -> loosened tolerance vs the pure-f32 reference.
    np.testing.assert_allclose(np.asarray(out.astype(jnp.float32)), np.asarray(ref),
                               rtol=3e-2, atol=6e-2)
    assert out.shape == (N, out_channels, 2 * H, 2 * W)

    print("KERNEL_OK")
</pallas_src>

<mosaic_0001>
module attributes {stable_mosaic.version = 11 : i64} {
  func.func @_ups_bottleneck_kernel(%arg0: i32, %arg1: i32, %arg2: memref<1x16x64xbf16, #tpu.memory_space<vmem>>, %arg3: memref<1x8x64xi8, #tpu.memory_space<vmem>>, %arg4: memref<12x16xbf16, #tpu.memory_space<vmem>>, %arg5: memref<12x1xf32, #tpu.memory_space<vmem>>, %arg6: memref<16x4xbf16, #tpu.memory_space<vmem>>, %arg7: memref<16x1xf32, #tpu.memory_space<vmem>>, %arg8: memref<32x16xbf16, #tpu.memory_space<vmem>>, %arg9: memref<32x1xf32, #tpu.memory_space<vmem>>, %arg10: memref<1x32x64xbf16, #tpu.memory_space<vmem>>) attributes {dimension_semantics = [#tpu.dimension_semantics<parallel>, #tpu.dimension_semantics<parallel>], iteration_bounds = array<i64: 2, 1>, scalar_prefetch = 0 : i64, scratch_operands = 0 : i64, tpu.core_type = #tpu.core_type<tc>, window_params = [{transform_indices = @transform_0, window_bounds = array<i64: 1, 16, 64>}, {transform_indices = @transform_1, window_bounds = array<i64: 1, 8, 64>}, {pipeline_mode = #tpu.pipeline_mode<synchronous>, transform_indices = @transform_2, window_bounds = array<i64: 12, 16>}, {pipeline_mode = #tpu.pipeline_mode<synchronous>, transform_indices = @transform_3, window_bounds = array<i64: 12, 1>}, {pipeline_mode = #tpu.pipeline_mode<synchronous>, transform_indices = @transform_4, window_bounds = array<i64: 16, 4>}, {pipeline_mode = #tpu.pipeline_mode<synchronous>, transform_indices = @transform_5, window_bounds = array<i64: 16, 1>}, {pipeline_mode = #tpu.pipeline_mode<synchronous>, transform_indices = @transform_6, window_bounds = array<i64: 32, 16>}, {pipeline_mode = #tpu.pipeline_mode<synchronous>, transform_indices = @transform_7, window_bounds = array<i64: 32, 1>}, {transform_indices = @transform_8, window_bounds = array<i64: 1, 32, 64>}]} {
    %c0 = arith.constant 0 : index
    %c0_0 = arith.constant 0 : index
    %c0_1 = arith.constant 0 : index
    %0 = vector.load %arg2[%c0, %c0_0, %c0_1] : memref<1x16x64xbf16, #tpu.memory_space<vmem>>, vector<1x16x64xbf16>
    %1 = vector.shape_cast %0 : vector<1x16x64xbf16> to vector<16x64xbf16>
    %c0_2 = arith.constant 0 : index
    %c0_3 = arith.constant 0 : index
    %2 = vector.load %arg4[%c0_2, %c0_3] : memref<12x16xbf16, #tpu.memory_space<vmem>>, vector<12x16xbf16>
    %cst = arith.constant dense<0.000000e+00> : vector<12x64xf32>
    %3 = tpu.matmul %2, %1, %cst {dimension_numbers = #tpu.dot_dimension_numbers<[1], [0], [0], [1], [0, 0, 1, 1], [], []>} : vector<12x16xbf16>, vector<16x64xbf16>, vector<12x64xf32> -> vector<12x64xf32>
    %c0_4 = arith.constant 0 : index
    %c0_5 = arith.constant 0 : index
    %4 = vector.load %arg5[%c0_4, %c0_5] : memref<12x1xf32, #tpu.memory_space<vmem>>, vector<12x1xf32>
    %5 = vector.broadcast %4 : vector<12x1xf32> to vector<12x64xf32>
    %6 = arith.addf %3, %5 : vector<12x64xf32>
    %7 = vector.extract_strided_slice %6 {offsets = [0, 0], sizes = [8, 64], strides = [1, 1]} : vector<12x64xf32> to vector<8x64xf32>
    %8 = vector.extract_strided_slice %6 {offsets = [8, 0], sizes = [4, 64], strides = [1, 1]} : vector<12x64xf32> to vector<4x64xf32>
    %cst_6 = arith.constant 0.000000e+00 : f32
    %9 = vector.broadcast %cst_6 : f32 to vector<4x64xf32>
    %10 = arith.maximumf %8, %9 : vector<4x64xf32>
    %c0_7 = arith.constant 0 : index
    %c0_8 = arith.constant 0 : index
    %11 = vector.load %arg6[%c0_7, %c0_8] : memref<16x4xbf16, #tpu.memory_space<vmem>>, vector<16x4xbf16>
    %12 = arith.truncf %10 : vector<4x64xf32> to vector<4x64xbf16>
    %cst_9 = arith.constant dense<0.000000e+00> : vector<16x64xf32>
    %13 = tpu.matmul %11, %12, %cst_9 {dimension_numbers = #tpu.dot_dimension_numbers<[1], [0], [0], [1], [0, 0, 1, 1], [], []>} : vector<16x4xbf16>, vector<4x64xbf16>, vector<16x64xf32> -> vector<16x64xf32>
    %c0_10 = arith.constant 0 : index
    %c0_11 = arith.constant 0 : index
    %14 = vector.load %arg7[%c0_10, %c0_11] : memref<16x1xf32, #tpu.memory_space<vmem>>, vector<16x1xf32>
    %15 = vector.broadcast %14 : vector<16x1xf32> to vector<16x64xf32>
    %16 = arith.addf %13, %15 : vector<16x64xf32>
    %cst_12 = arith.constant 0.000000e+00 : f32
    %17 = vector.broadcast %cst_12 : f32 to vector<16x64xf32>
    %18 = arith.maximumf %16, %17 : vector<16x64xf32>
    %c0_13 = arith.constant 0 : index
    %c0_14 = arith.constant 0 : index
    %19 = vector.load %arg8[%c0_13, %c0_14] : memref<32x16xbf16, #tpu.memory_space<vmem>>, vector<32x16xbf16>
    %20 = arith.truncf %18 : vector<16x64xf32> to vector<16x64xbf16>
    %cst_15 = arith.constant dense<0.000000e+00> : vector<32x64xf32>
    %21 = tpu.matmul %19, %20, %cst_15 {dimension_numbers = #tpu.dot_dimension_numbers<[1], [0], [0], [1], [0, 0, 1, 1], [], []>} : vector<32x16xbf16>, vector<16x64xbf16>, vector<32x64xf32> -> vector<32x64xf32>
    %c0_16 = arith.constant 0 : index
    %c0_17 = arith.constant 0 : index
    %22 = vector.load %arg9[%c0_16, %c0_17] : memref<32x1xf32, #tpu.memory_space<vmem>>, vector<32x1xf32>
    %23 = vector.broadcast %22 : vector<32x1xf32> to vector<32x64xf32>
    %24 = arith.addf %21, %23 : vector<32x64xf32>
    %cst_18 = arith.constant 0.000000e+00 : f32
    %25 = vector.broadcast %cst_18 : f32 to vector<32x64xf32>
    %26 = arith.maximumf %24, %25 : vector<32x64xf32>
    %c0_19 = arith.constant 0 : index
    %c0_20 = arith.constant 0 : index
    %c0_21 = arith.constant 0 : index
    %27 = vector.load %arg3[%c0_19, %c0_20, %c0_21] : memref<1x8x64xi8, #tpu.memory_space<vmem>>, vector<1x8x64xi8>
    %28 = vector.shape_cast %27 : vector<1x8x64xi8> to vector<8x64xi8>
    %29 = arith.extsi %28 : vector<8x64xi8> to vector<8x64xi32>
    %c0_i32 = arith.constant 0 : i32
    %30 = vector.broadcast %c0_i32 : i32 to vector<8x64xi32>
    %31 = arith.cmpi eq, %29, %30 : vector<8x64xi32>
    %cst_22 = arith.constant 0.000000e+00 : f32
    %32 = vector.broadcast %cst_22 : f32 to vector<8x64xf32>
    %33 = arith.select %31, %7, %32 : vector<8x64xi1>, vector<8x64xf32>
    %c1_i32 = arith.constant 1 : i32
    %34 = vector.broadcast %c1_i32 : i32 to vector<8x64xi32>
    %35 = arith.cmpi eq, %29, %34 : vector<8x64xi32>
    %cst_23 = arith.constant 0.000000e+00 : f32
    %36 = vector.broadcast %cst_23 : f32 to vector<8x64xf32>
    %37 = arith.select %35, %7, %36 : vector<8x64xi1>, vector<8x64xf32>
    %c2_i32 = arith.constant 2 : i32
    %38 = vector.broadcast %c2_i32 : i32 to vector<8x64xi32>
    %39 = arith.cmpi eq, %29, %38 : vector<8x64xi32>
    %cst_24 = arith.constant 0.000000e+00 : f32
    %40 = vector.broadcast %cst_24 : f32 to vector<8x64xf32>
    %41 = arith.select %39, %7, %40 : vector<8x64xi1>, vector<8x64xf32>
    %c3_i32 = arith.constant 3 : i32
    %42 = vector.broadcast %c3_i32 : i32 to vector<8x64xi32>
    %43 = arith.cmpi eq, %29, %42 : vector<8x64xi32>
    %cst_25 = arith.constant 0.000000e+00 : f32
    %44 = vector.broadcast %cst_25 : f32 to vector<8x64xf32>
    %45 = arith.select %43, %7, %44 : vector<8x64xi1>, vector<8x64xf32>
    %46 = tpu.concatenate %33, %37, %41, %45 in 0 : vector<8x64xf32>, vector<8x64xf32>, vector<8x64xf32>, vector<8x64xf32> -> vector<32x64xf32>
    %47 = arith.addf %46, %26 : vector<32x64xf32>
    %cst_26 = arith.constant 0.000000e+00 : f32
    %48 = vector.broadcast %cst_26 : f32 to vector<32x64xf32>
    %49 = arith.maximumf %47, %48 : vector<32x64xf32>
    %50 = arith.truncf %49 : vector<32x64xf32> to vector<32x64xbf16>
    %c0_27 = arith.constant 0 : index
    %c0_28 = arith.constant 0 : index
    %c0_29 = arith.constant 0 : index
    %51 = vector.load %arg10[%c0_27, %c0_28, %c0_29] : memref<1x32x64xbf16, #tpu.memory_space<vmem>>, vector<1x32x64xbf16>
    %52 = vector.shape_cast %51 : vector<1x32x64xbf16> to vector<32x64xbf16>
    %53 = vector.shape_cast %50 : vector<32x64xbf16> to vector<1x32x64xbf16>
    tpu.vector_store %arg10[%c0_27, %c0_28, %c0_29], %53 {strides = array<i32>} : memref<1x32x64xbf16, #tpu.memory_space<vmem>>, vector<1x32x64xbf16>,
    return
  }
  func.func @transform_0(%arg0: i32, %arg1: i32) -> (i32, i32, i32) {
    %c0_i32 = arith.constant 0 : i32
    %c0_i32_0 = arith.constant 0 : i32
    return %arg0, %c0_i32, %arg1 : i32, i32, i32
  }
  func.func @transform_1(%arg0: i32, %arg1: i32) -> (i32, i32, i32) {
    %c0_i32 = arith.constant 0 : i32
    %c0_i32_0 = arith.constant 0 : i32
    return %arg0, %c0_i32, %arg1 : i32, i32, i32
  }
  func.func @transform_2(%arg0: i32, %arg1: i32) -> (i32, i32) {
    %c0_i32 = arith.constant 0 : i32
    %c0_i32_0 = arith.constant 0 : i32
    %c0_i32_1 = arith.constant 0 : i32
    return %c0_i32, %c0_i32_0 : i32, i32
  }
  func.func @transform_3(%arg0: i32, %arg1: i32) -> (i32, i32) {
    %c0_i32 = arith.constant 0 : i32
    %c0_i32_0 = arith.constant 0 : i32
    %c0_i32_1 = arith.constant 0 : i32
    return %c0_i32, %c0_i32_0 : i32, i32
  }
  func.func @transform_4(%arg0: i32, %arg1: i32) -> (i32, i32) {
    %c0_i32 = arith.constant 0 : i32
    %c0_i32_0 = arith.constant 0 : i32
    %c0_i32_1 = arith.constant 0 : i32
    return %c0_i32, %c0_i32_0 : i32, i32
  }
  func.func @transform_5(%arg0: i32, %arg1: i32) -> (i32, i32) {
    %c0_i32 = arith.constant 0 : i32
    %c0_i32_0 = arith.constant 0 : i32
    %c0_i32_1 = arith.constant 0 : i32
    return %c0_i32, %c0_i32_0 : i32, i32
  }
  func.func @transform_6(%arg0: i32, %arg1: i32) -> (i32, i32) {
    %c0_i32 = arith.constant 0 : i32
    %c0_i32_0 = arith.constant 0 : i32
    %c0_i32_1 = arith.constant 0 : i32
    return %c0_i32, %c0_i32_0 : i32, i32
  }
  func.func @transform_7(%arg0: i32, %arg1: i32) -> (i32, i32) {
    %c0_i32 = arith.constant 0 : i32
    %c0_i32_0 = arith.constant 0 : i32
    %c0_i32_1 = arith.constant 0 : i32
    return %c0_i32, %c0_i32_0 : i32, i32
  }
  func.func @transform_8(%arg0: i32, %arg1: i32) -> (i32, i32, i32) {
    %c0_i32 = arith.constant 0 : i32
    %c0_i32_0 = arith.constant 0 : i32
    return %arg0, %c0_i32, %arg1 : i32, i32, i32
  }
}

</mosaic_0001>

<llo_original>
// kernel: tpu_custom_call.1
$region0: #{tpu_custom_call.1}
  #allocation0 [shape = 'u32[]', space=smem, size = 0x4, offset = 0x4, fixed_abs, tag = 'smem constant byte address 0x4 - core index']
  #allocation1 [shape = 'u32[72,128]{1,0:T(1,128)}', space=vmem, size = 0x9000, scoped, tag = 'internal scratch']
  %s0 = inlined_call_operand.vmem [shape: bf16[2,16,64], index: 0, kind: input, shape index: {}]
  %s1 = inlined_call_operand.vmem [shape: s8[2,8,64], index: 1, kind: input, shape index: {}]
  %s2 = inlined_call_operand.vmem [shape: bf16[12,16], index: 2, kind: input, shape index: {}]
  %s3 = inlined_call_operand.vmem [shape: f32[12,1], index: 3, kind: input, shape index: {}]
  %s4 = inlined_call_operand.vmem [shape: bf16[16,4], index: 4, kind: input, shape index: {}]
  %s5 = inlined_call_operand.vmem [shape: f32[16,1], index: 5, kind: input, shape index: {}]
  %s6 = inlined_call_operand.vmem [shape: bf16[32,16], index: 6, kind: input, shape index: {}]
  %s7 = inlined_call_operand.vmem [shape: f32[32,1], index: 7, kind: input, shape index: {}]
  %s8 = inlined_call_operand.hbm [shape: bf16[2,32,64], index: 8, kind: output, shape index: {}]
  %s9 = sld [smem:[#allocation0]]
  $region65: #{tpu_custom_call.1} parent=0
    _
  %s11 = ssub.s32 1, %s9
  %s12 = scalar_select 0, %s11, %s9
  $region1: #{tpu_custom_call.1} parent=0
    #allocation2 [shape = 'u8[16384]{0}', space=vmem, size = 0x4000, scoped, tag = 'output window, operand 0']
    #allocation3 [shape = 's32[2]{0}', space=sflag, size = 0x8, scoped, tag = 'scoped memory for tpu_custom_call.1']
    %13 = vsyncpa [#allocation3], 0
    %s14 = scalar_lea.sflag [#allocation3], 1
    %15 = vsyncpa %s14, 0
    loop: start=0, step=1, limit=4
    $region2: #{tpu_custom_call.1} parent=1 // loop_pre_header
      _
    $region3: #{tpu_custom_call.1} parent=1 // loop_header
      %s17 = sphi 0, %s21
      %p18 = scmp.ge.s32.totalorder %s17, 4
      %s24 = sphi 0, %s36
      %s25 = sphi 0, %s32
      %s26 = sphi 0, %s24
      %s27 = sphi 0, %s25
      %s28 = sphi 0, %s26
      %s29 = sphi 0, %s27
      %s41 = sphi 0, %s43
      %s44 = sphi 0, %s41
      %s45 = sphi 0, %s44
      %s61 = sphi 0, %s45
      %s69 = sphi 0, %s71
      %s72 = sphi 0, %s69
      %s73 = sphi 0, %s72
      %s89 = sphi 0, %s73
      %s93 = sphi 0, %s93
      %s95 = sphi 0, %s93
      %s96 = sphi 0, %s95
      %s110 = sphi 0, %s96
      %s114 = sphi 0, %s114
      %s116 = sphi 0, %s114
      %s117 = sphi 0, %s116
      %s131 = sphi 0, %s117
      %s135 = sphi 0, %s135
      %s137 = sphi 0, %s135
      %s138 = sphi 0, %s137
      %s152 = sphi 0, %s138
      %s156 = sphi 0, %s156
      %s158 = sphi 0, %s156
      %s159 = sphi 0, %s158
      %s173 = sphi 0, %s159
      %s177 = sphi 0, %s177
      %s179 = sphi 0, %s177
      %s180 = sphi 0, %s179
      %s194 = sphi 0, %s180
      %s198 = sphi 0, %s198
      %s200 = sphi 0, %s198
      %s201 = sphi 0, %s200
      %s215 = sphi 0, %s201
      %s223 = sphi 0, %s225
      %s226 = sphi 0, %s223
      %s227 = sphi 0, %s226
      %s243 = sphi 0, %s227
    $region4: #{tpu_custom_call.1} parent=1 // loop_header_branch
      %20 = sbr.rel (%p18) target = $region8
    $region5: #{tpu_custom_call.1} parent=1 // loop_body
      %s22 = ssub.s32 %s17, 1
      %s23 = ssub.s32 %s17, 2
      %s30 = sadd.s32 1, %s25
      %p31 = scmp.ge.s32.totalorder %s30, 1
      %s32 = scalar_select %p31, 0, %s30
      %s33 = sadd.s32 1, %s24
      %s34 = scalar_select %p31, %s33, %s24
      %p35 = scmp.ge.s32.totalorder %s34, 2
      %s36 = scalar_select %p35, 0, %s34
      %s37 = ssub.s32 %s24, %s36
      %s38 = ssub.s32 %s25, %s32
      %s39 = sor.u32 %s37, %s38
      %p40 = scmp.eq.s32.totalorder %s39, 0
      %s42 = sadd.s32 %s41, 1
      %s43 = scalar_select %p40, %s41, %s42
      %p46 = pneg %p40
      %p47 = scmp.eq.s32.totalorder %s17, 1
      %p48 = por %p46, %p47
      %p49 = scmp.ne.s32.totalorder %s41, %s44
      %p50 = scmp.eq.s32.totalorder %s17, 0
      %p51 = por %p49, %p50
      %p52 = scmp.ne.s32.totalorder %s41, %s44
      %p53 = scmp.eq.s32.totalorder %s22, 1
      %p54 = por %p52, %p53
      %p55 = scmp.ne.s32.totalorder %s44, %s45
      %p56 = scmp.eq.s32.totalorder %s22, 0
      %p57 = por %p55, %p56
      %p58 = scmp.ne.s32.totalorder %s44, %s45
      %p59 = scmp.eq.s32.totalorder %s23, 1
      %p60 = por %p58, %p59
      %p62 = scmp.ne.s32.totalorder %s45, %s61
      %p63 = scmp.eq.s32.totalorder %s23, 0
      %p64 = por %p62, %p63
      %s65 = ssub.s32 %s24, %s36
      %s66 = ssub.s32 %s25, %s32
      %s67 = sor.u32 %s65, %s66
      %p68 = scmp.eq.s32.totalorder %s67, 0
      %s70 = sadd.s32 %s69, 1
      %s71 = scalar_select %p68, %s69, %s70
      %p74 = pneg %p68
      %p75 = scmp.eq.s32.totalorder %s17, 1
      %p76 = por %p74, %p75
      %p77 = scmp.ne.s32.totalorder %s69, %s72
      %p78 = scmp.eq.s32.totalorder %s17, 0
      %p79 = por %p77, %p78
      %p80 = scmp.ne.s32.totalorder %s69, %s72
      %p81 = scmp.eq.s32.totalorder %s22, 1
      %p82 = por %p80, %p81
      %p83 = scmp.ne.s32.totalorder %s72, %s73
      %p84 = scmp.eq.s32.totalorder %s22, 0
      %p85 = por %p83, %p84
      %p86 = scmp.ne.s32.totalorder %s72, %s73
      %p87 = scmp.eq.s32.totalorder %s23, 1
      %p88 = por %p86, %p87
      %p90 = scmp.ne.s32.totalorder %s73, %s89
      %p91 = scmp.eq.s32.totalorder %s23, 0
      %p92 = por %p90, %p91
      %s94 = sadd.s32 %s93, 1
      %p97 = scmp.eq.s32.totalorder %s17, 1
      %p98 = scmp.ne.s32.totalorder %s93, %s95
      %p99 = scmp.eq.s32.totalorder %s17, 0
      %p100 = por %p98, %p99
      %p101 = scmp.ne.s32.totalorder %s93, %s95
      %p102 = scmp.eq.s32.totalorder %s22, 1
      %p103 = por %p101, %p102
      %p104 = scmp.ne.s32.totalorder %s95, %s96
      %p105 = scmp.eq.s32.totalorder %s22, 0
      %p106 = por %p104, %p105
      %p107 = scmp.ne.s32.totalorder %s95, %s96
      %p108 = scmp.eq.s32.totalorder %s23, 1
      %p109 = por %p107, %p108
      %p111 = scmp.ne.s32.totalorder %s96, %s110
      %p112 = scmp.eq.s32.totalorder %s23, 0
      %p113 = por %p111, %p112
      %s115 = sadd.s32 %s114, 1
      %p118 = scmp.eq.s32.totalorder %s17, 1
      %p119 = scmp.ne.s32.totalorder %s114, %s116
      %p120 = scmp.eq.s32.totalorder %s17, 0
      %p121 = por %p119, %p120
      %p122 = scmp.ne.s32.totalorder %s114, %s116
      %p123 = scmp.eq.s32.totalorder %s22, 1
      %p124 = por %p122, %p123
      %p125 = scmp.ne.s32.totalorder %s116, %s117
      %p126 = scmp.eq.s32.totalorder %s22, 0
      %p127 = por %p125, %p126
      %p128 = scmp.ne.s32.totalorder %s116, %s117
      %p129 = scmp.eq.s32.totalorder %s23, 1
      %p130 = por %p128, %p129
      %p132 = scmp.ne.s32.totalorder %s117, %s131
      %p133 = scmp.eq.s32.totalorder %s23, 0
      %p134 = por %p132, %p133
      %s136 = sadd.s32 %s135, 1
      %p139 = scmp.eq.s32.totalorder %s17, 1
      %p140 = scmp.ne.s32.totalorder %s135, %s137
      %p141 = scmp.eq.s32.totalorder %s17, 0
      %p142 = por %p140, %p141
      %p143 = scmp.ne.s32.totalorder %s135, %s137
      %p144 = scmp.eq.s32.totalorder %s22, 1
      %p145 = por %p143, %p144
      %p146 = scmp.ne.s32.totalorder %s137, %s138
      %p147 = scmp.eq.s32.totalorder %s22, 0
      %p148 = por %p146, %p147
      %p149 = scmp.ne.s32.totalorder %s137, %s138
      %p150 = scmp.eq.s32.totalorder %s23, 1
      %p151 = por %p149, %p150
      %p153 = scmp.ne.s32.totalorder %s138, %s152
      %p154 = scmp.eq.s32.totalorder %s23, 0
      %p155 = por %p153, %p154
      %s157 = sadd.s32 %s156, 1
      %p160 = scmp.eq.s32.totalorder %s17, 1
      %p161 = scmp.ne.s32.totalorder %s156, %s158
      %p162 = scmp.eq.s32.totalorder %s17, 0
      %p163 = por %p161, %p162
      %p164 = scmp.ne.s32.totalorder %s156, %s158
      %p165 = scmp.eq.s32.totalorder %s22, 1
      %p166 = por %p164, %p165
      %p167 = scmp.ne.s32.totalorder %s158, %s159
      %p168 = scmp.eq.s32.totalorder %s22, 0
      %p169 = por %p167, %p168
      %p170 = scmp.ne.s32.totalorder %s158, %s159
      %p171 = scmp.eq.s32.totalorder %s23, 1
      %p172 = por %p170, %p171
      %p174 = scmp.ne.s32.totalorder %s159, %s173
      %p175 = scmp.eq.s32.totalorder %s23, 0
      %p176 = por %p174, %p175
      %s178 = sadd.s32 %s177, 1
      %p181 = scmp.eq.s32.totalorder %s17, 1
      %p182 = scmp.ne.s32.totalorder %s177, %s179
      %p183 = scmp.eq.s32.totalorder %s17, 0
      %p184 = por %p182, %p183
      %p185 = scmp.ne.s32.totalorder %s177, %s179
      %p186 = scmp.eq.s32.totalorder %s22, 1
      %p187 = por %p185, %p186
      %p188 = scmp.ne.s32.totalorder %s179, %s180
      %p189 = scmp.eq.s32.totalorder %s22, 0
      %p190 = por %p188, %p189
      %p191 = scmp.ne.s32.totalorder %s179, %s180
      %p192 = scmp.eq.s32.totalorder %s23, 1
      %p193 = por %p191, %p192
      %p195 = scmp.ne.s32.totalorder %s180, %s194
      %p196 = scmp.eq.s32.totalorder %s23, 0
      %p197 = por %p195, %p196
      %s199 = sadd.s32 %s198, 1
      %p202 = scmp.eq.s32.totalorder %s17, 1
      %p203 = scmp.ne.s32.totalorder %s198, %s200
      %p204 = scmp.eq.s32.totalorder %s17, 0
      %p205 = por %p203, %p204
      %p206 = scmp.ne.s32.totalorder %s198, %s200
      %p207 = scmp.eq.s32.totalorder %s22, 1
      %p208 = por %p206, %p207
      %p209 = scmp.ne.s32.totalorder %s200, %s201
      %p210 = scmp.eq.s32.totalorder %s22, 0
      %p211 = por %p209, %p210
      %p212 = scmp.ne.s32.totalorder %s200, %s201
      %p213 = scmp.eq.s32.totalorder %s23, 1
      %p214 = por %p212, %p213
      %p216 = scmp.ne.s32.totalorder %s201, %s215
      %p217 = scmp.eq.s32.totalorder %s23, 0
      %p218 = por %p216, %p217
      %s219 = ssub.s32 %s24, %s36
      %s220 = ssub.s32 %s25, %s32
      %s221 = sor.u32 %s219, %s220
      %p222 = scmp.eq.s32.totalorder %s221, 0
      %s224 = sadd.s32 %s223, 1
      %s225 = scalar_select %p222, %s223, %s224
      %p228 = pneg %p222
      %p229 = scmp.eq.s32.totalorder %s17, 1
      %p230 = por %p228, %p229
      %p231 = scmp.ne.s32.totalorder %s223, %s226
      %p232 = scmp.eq.s32.totalorder %s17, 0
      %p233 = por %p231, %p232
      %p234 = scmp.ne.s32.totalorder %s223, %s226
      %p235 = scmp.eq.s32.totalorder %s22, 1
      %p236 = por %p234, %p235
      %p237 = scmp.ne.s32.totalorder %s226, %s227
      %p238 = scmp.eq.s32.totalorder %s22, 0
      %p239 = por %p237, %p238
      %p240 = scmp.ne.s32.totalorder %s226, %s227
      %p241 = scmp.eq.s32.totalorder %s23, 1
      %p242 = por %p240, %p241
      %p244 = scmp.ne.s32.totalorder %s227, %s243
      %p245 = scmp.eq.s32.totalorder %s23, 0
      %p246 = por %p244, %p245
      %p247 = scmp.le.s32.totalorder 1, %s17
      %p248 = scmp.lt.s32.totalorder %s17, 3
      %p249 = pnand %p247, %p248
      %p250 = pneg %p249
      // Predicated region
      $region9: #{tpu_custom_call.1} parent=5 // pred_check
        _
      $region10: #{tpu_custom_call.1} parent=5 // pred_check_branch
        %252 = sbr.rel (%p249) target = $region12
      $region11: #{tpu_custom_call.1} parent=5 // pred_region
        %s253 = ssub.s32 %s17, 1
        // Predicated region
        $region13: #{tpu_custom_call.1} parent=11 // pred_check
          %p254 = pneg %p106
        $region14: #{tpu_custom_call.1} parent=11 // pred_check_branch
          %256 = sbr.rel (%p254) target = $region16
        $region15: #{tpu_custom_call.1} parent=11 // pred_region
          _
        $region16: #{tpu_custom_call.1} parent=11 // pred_fallthru
          _
        // Predicated region
        $region17: #{tpu_custom_call.1} parent=11 // pred_check
          %p257 = pneg %p127
        $region18: #{tpu_custom_call.1} parent=11 // pred_check_branch
          %259 = sbr.rel (%p257) target = $region20
        $region19: #{tpu_custom_call.1} parent=11 // pred_region
          _
        $region20: #{tpu_custom_call.1} parent=11 // pred_fallthru
          _
        // Predicated region
        $region21: #{tpu_custom_call.1} parent=11 // pred_check
          %p260 = pneg %p148
        $region22: #{tpu_custom_call.1} parent=11 // pred_check_branch
          %262 = sbr.rel (%p260) target = $region24
        $region23: #{tpu_custom_call.1} parent=11 // pred_region
          _
        $region24: #{tpu_custom_call.1} parent=11 // pred_fallthru
          _
        // Predicated region
        $region25: #{tpu_custom_call.1} parent=11 // pred_check
          %p263 = pneg %p169
        $region26: #{tpu_custom_call.1} parent=11 // pred_check_branch
          %265 = sbr.rel (%p263) target = $region28
        $region27: #{tpu_custom_call.1} parent=11 // pred_region
          _
        $region28: #{tpu_custom_call.1} parent=11 // pred_fallthru
          _
        // Predicated region
        $region29: #{tpu_custom_call.1} parent=11 // pred_check
          %p266 = pneg %p190
        $region30: #{tpu_custom_call.1} parent=11 // pred_check_branch
          %268 = sbr.rel (%p266) target = $region32
        $region31: #{tpu_custom_call.1} parent=11 // pred_region
          _
        $region32: #{tpu_custom_call.1} parent=11 // pred_fallthru
          _
        // Predicated region
        $region33: #{tpu_custom_call.1} parent=11 // pred_check
          %p269 = pneg %p211
        $region34: #{tpu_custom_call.1} parent=11 // pred_check_branch
          %271 = sbr.rel (%p269) target = $region36
        $region35: #{tpu_custom_call.1} parent=11 // pred_region
          _
        $region36: #{tpu_custom_call.1} parent=11 // pred_fallthru
          _
      $region12: #{tpu_custom_call.1} parent=5 // pred_fallthru
        _
      %p272 = scmp.lt.s32.totalorder %s17, 2
      // Predicated region
      $region37: #{tpu_custom_call.1} parent=5 // pred_check
        %p273 = pneg %p272
      $region38: #{tpu_custom_call.1} parent=5 // pred_check_branch
        %275 = sbr.rel (%p273) target = $region40
      $region39: #{tpu_custom_call.1} parent=5 // pred_region
        // Predicated region
        $region41: #{tpu_custom_call.1} parent=39 // pred_check
          %p276 = pneg %p51
        $region42: #{tpu_custom_call.1} parent=39 // pred_check_branch
          %278 = sbr.rel (%p276) target = $region44
        $region43: #{tpu_custom_call.1} parent=39 // pred_region
          %p279 = scmp.lt.s32.totalorder %s24, 1
          %s280 = scalar_select %p279, %s24, 1
          %p281 = scmp.lt.s32.totalorder %s25, 0
          %s282 = scalar_select %p281, %s25, 0
          %s283 = smul.addr %s280, 2
          %s284 = sadd.s32 %s282, %s283
          %s285 = smul.addr %s284, 4
          %s286 = scalar_lea.vmem %s0, %s285
        $region44: #{tpu_custom_call.1} parent=39 // pred_fallthru
          _
        // Predicated region
        $region45: #{tpu_custom_call.1} parent=39 // pred_check
          %p287 = pneg %p79
        $region46: #{tpu_custom_call.1} parent=39 // pred_check_branch
          %289 = sbr.rel (%p287) target = $region48
        $region47: #{tpu_custom_call.1} parent=39 // pred_region
          %p290 = scmp.lt.s32.totalorder %s24, 1
          %s291 = scalar_select %p290, %s24, 1
          %p292 = scmp.lt.s32.totalorder %s25, 0
          %s293 = scalar_select %p292, %s25, 0
          %s294 = sadd.s32 %s293, %s291
          %s295 = smul.addr %s294, 2
          %s296 = scalar_lea.vmem %s1, %s295
        $region48: #{tpu_custom_call.1} parent=39 // pred_fallthru
          _
      $region40: #{tpu_custom_call.1} parent=5 // pred_fallthru
        _
      %p297 = scmp.le.s32.totalorder 1, %s17
      %p298 = scmp.lt.s32.totalorder %s17, 3
      %p299 = pnand %p297, %p298
      %p300 = pneg %p299
      // Predicated region
      $region49: #{tpu_custom_call.1} parent=5 // pred_check
        _
      $region50: #{tpu_custom_call.1} parent=5 // pred_check_branch
        %302 = sbr.rel (%p299) target = $region52
      $region51: #{tpu_custom_call.1} parent=5 // pred_region
        %s303 = ssub.s32 %s17, 1
        %p304 = scmp.lt.s32.totalorder %s26, 1
        %s305 = scalar_select %p304, %s26, 1
        %p306 = scmp.lt.s32.totalorder %s27, 0
        %s307 = scalar_select %p306, %s27, 0
        %s308 = smul.addr %s305, 2
        %s309 = sadd.s32 %s307, %s308
        %s310 = smul.addr %s309, 4
        %s311 = scalar_lea.vmem %s0, %s310
        %p312 = pneg %p57
        %p313 = pneg %p54
        %p314 = scmp.lt.s32.totalorder %s26, 1
        %s315 = scalar_select %p314, %s26, 1
        %p316 = scmp.lt.s32.totalorder %s27, 0
        %s317 = scalar_select %p316, %s27, 0
        %s318 = sadd.s32 %s317, %s315
        %s319 = smul.addr %s318, 2
        %s320 = scalar_lea.vmem %s1, %s319
        %p321 = pneg %p85
        %p322 = pneg %p82
        %p323 = pneg %p106
        %p324 = pneg %p103
        %p325 = pneg %p127
        %p326 = pneg %p124
        %p327 = pneg %p148
        %p328 = pneg %p145
        %p329 = pneg %p169
        %p330 = pneg %p166
        %p331 = pneg %p190
        %p332 = pneg %p187
        %p333 = pneg %p211
        %p334 = pneg %p208
        %p335 = pneg %p239
        %p336 = pneg %p236
        %s337 = sand.u32 %s226, 1
        %s338 = scalar_lea.sflag [#allocation3], %s337
        %s339 = sand.u32 %s226, 1
        %s340 = smul.addr %s339, 16
        %s341 = scalar_lea.vmem [#allocation2], %s340
        %p342 = scmp.lt.s32.totalorder %s26, 1
        %s343 = scalar_select %p342, %s26, 1
        %p344 = scmp.lt.s32.totalorder %s27, 0
        %s345 = scalar_select %p344, %s27, 0
        %s346 = smul.addr %s343, 2
        %s347 = sadd.s32 %s345, %s346
        %s348 = smul.addr %s347, 4
        %s349 = scalar_lea.vmem %s0, %s348
        %p350 = scmp.lt.s32.totalorder %s26, 1
        %s351 = scalar_select %p350, %s26, 1
        %p352 = scmp.lt.s32.totalorder %s27, 0
        %s353 = scalar_select %p352, %s27, 0
        %s354 = sadd.s32 %s353, %s351
        %s355 = smul.addr %s354, 2
        %s356 = scalar_lea.vmem %s1, %s355
        %v358 = vld [vmem:[%s349] sm:$0xf]
        %v359 = vld [vmem:[%s349 + $0x4] sm:$0xf]
        %v360 = vld [vmem:[%s2] sm:$0xf]
        %v361 = vld [vmem:[%s2 + $0x4] sm:$0x3]
        %v362 = vld [vmem:[%s3] sm:$0xff]
        %v363 = vld [vmem:[%s3 + $0x8] sm:$0xf]
        %365 = vset.pattern.permute.xlu0 0
        %366 = vperm.xlu0 %365, %v362
        %v367 = vpop.permute.xlu0 %366
        %370 = vset.pattern.permute.xlu0 0
        %371 = vperm.xlu0 %370, %v363
        %v372 = vpop.permute.xlu0 %371
        %v376 = vunpack.c.l.b16 %v360
        %v377 = vunpack.c.l.b16 %v361
        %v378 = vpack.c.b16 %v377, %v376
        %v381 = vunpack.c.l.b16 %v358
        %v382 = vunpack.c.l.b16 %v359
        %v383 = vpack.c.b16 %v382, %v381
        %vm385 = vcmask 130048
        %v387 = vsel %vm385, %v378, 0
        %389 = vmatpush.bf16.msra.mxu0 0
        %390 = vmatpush.bf16.msra.mxu0 0
        %391 = vmatpush.bf16.msra.mxu0 0
        %392 = vmatpush.bf16.msra.mxu0 0
        %393 = vmatpush.bf16.msra.mxu0 0
        %394 = vmatpush.bf16.msra.mxu0 0
        %395 = vmatpush.bf16.msra.mxu0 0
        %396 = vmatpush.bf16.msra.mxu0 %v383
        %397 = vmatmul.bf16.gmra.mxu0 %v387
        %v398 = vpop.f32.mrf.mxu0
        %v399 = vadd.f32 %v367, %v398
        %v400 = vpop.f32.mrf.mxu0
        %v401 = vadd.f32 %v372, %v400
        %402 = vdwg.mxu0
        %v403 = vmax.f32 %v401, 0.0
        %v404 = vld [vmem:[%s4] sm:$0xf]
        %v405 = vld [vmem:[%s4 + $0x4] sm:$0xf]
        %v406 = vpack.c.bf16 %v403, %v403
        %v407 = vld [vmem:[%s5] sm:$0xff]
        %v408 = vld [vmem:[%s5 + $0x8] sm:$0xff]
        %410 = vset.pattern.permute.xlu0 0
        %411 = vperm.xlu0 %410, %v407
        %v412 = vpop.permute.xlu0 %411
        %415 = vset.pattern.permute.xlu0 0
        %416 = vperm.xlu0 %415, %v408
        %v417 = vpop.permute.xlu0 %416
        %v421 = vunpack.c.l.b16 %v404
        %v422 = vunpack.c.l.b16 %v405
        %v423 = vpack.c.b16 %v422, %v421
        %vm424 = vcmask 31744
        %v426 = vsel %vm424, %v423, 0
        %vm428 = vcmask 1041408
        %v430 = vsel %vm428, %v406, 0
        %432 = vmatpush.bf16.msra.mxu0 0
        %433 = vmatpush.bf16.msra.mxu0 0
        %434 = vmatpush.bf16.msra.mxu0 0
        %435 = vmatpush.bf16.msra.mxu0 0
        %436 = vmatpush.bf16.msra.mxu0 0
        %437 = vmatpush.bf16.msra.mxu0 0
        %438 = vmatpush.bf16.msra.mxu0 0
        %439 = vmatpush.bf16.msra.mxu0 %v430
        %440 = vmatmul.bf16.gmra.mxu0 %v426
        %v441 = vpop.f32.mrf.mxu0
        %v442 = vadd.f32 %v412, %v441
        %v443 = vpop.f32.mrf.mxu0
        %v444 = vadd.f32 %v417, %v443
        %445 = vdwg.mxu0
        %v446 = vmax.f32 %v442, 0.0
        %v447 = vmax.f32 %v444, 0.0
        %v448 = vld [vmem:[%s6] sm:$0xf]
        %v449 = vld [vmem:[%s6 + $0x4] sm:$0xf]
        %v450 = vld [vmem:[%s6 + $0x8] sm:$0xf]
        %v451 = vld [vmem:[%s6 + $0xc] sm:$0xf]
        %v452 = vpack.c.bf16 %v447, %v446
        %v453 = vld [vmem:[%s7] sm:$0xff]
        %v454 = vld [vmem:[%s7 + $0x8] sm:$0xff]
        %v455 = vld [vmem:[%s7 + $0x10] sm:$0xff]
        %v456 = vld [vmem:[%s7 + $0x18] sm:$0xff]
        %458 = vset.pattern.permute.xlu0 0
        %459 = vperm.xlu0 %458, %v453
        %v460 = vpop.permute.xlu0 %459
        %463 = vset.pattern.permute.xlu0 0
        %464 = vperm.xlu0 %463, %v454
        %v465 = vpop.permute.xlu0 %464
        %468 = vset.pattern.permute.xlu0 0
        %469 = vperm.xlu0 %468, %v455
        %v470 = vpop.permute.xlu0 %469
        %473 = vset.pattern.permute.xlu0 0
        %474 = vperm.xlu0 %473, %v456
        %v475 = vpop.permute.xlu0 %474
        %v481 = vunpack.c.l.b16 %v448
        %v482 = vunpack.c.l.b16 %v449
        %v483 = vunpack.c.l.b16 %v450
        %v484 = vunpack.c.l.b16 %v451
        %v485 = vpack.c.b16 %v482, %v481
        %v486 = vpack.c.b16 %v484, %v483
        %v488 = vsel %vm385, %v485, 0
        %v491 = vsel %vm385, %v486, 0
        %493 = vmatpush.bf16.msra.mxu0 0
        %494 = vmatpush.bf16.msra.mxu0 0
        %495 = vmatpush.bf16.msra.mxu0 0
        %496 = vmatpush.bf16.msra.mxu0 0
        %497 = vmatpush.bf16.msra.mxu0 0
        %498 = vmatpush.bf16.msra.mxu0 0
        %499 = vmatpush.bf16.msra.mxu0 0
        %500 = vmatpush.bf16.msra.mxu0 %v452
        %501 = vmatmul.bf16.gmra.mxu0 %v488
        %v502 = vpop.f32.mrf.mxu0
        %v503 = vadd.f32 %v460, %v502
        %v504 = vpop.f32.mrf.mxu0
        %v505 = vadd.f32 %v465, %v504
        %506 = vmatmul.bf16.gmra.mxu0 %v491
        %v507 = vpop.f32.mrf.mxu0
        %v508 = vadd.f32 %v470, %v507
        %v509 = vpop.f32.mrf.mxu0
        %v510 = vadd.f32 %v475, %v509
        %511 = vdwg.mxu0
        %v512 = vmax.f32 %v503, 0.0
        %v513 = vmax.f32 %v505, 0.0
        %v514 = vmax.f32 %v508, 0.0
        %v515 = vmax.f32 %v510, 0.0
        %v516 = vld [vmem:[%s356] sm:$0x3]
        %v517 = vunpack.c.0.s8 %v516
        %vm518 = vcmp.eq.s32.totalorder %v517, 0
        %v519 = vsel %vm518, %v399, 0.0
        %vm520 = vcmp.eq.s32.totalorder %v517, 1
        %v521 = vsel %vm520, %v399, 0.0
        %vm522 = vcmp.eq.s32.totalorder %v517, 2
        %v523 = vsel %vm522, %v399, 0.0
        %vm524 = vcmp.eq.s32.totalorder %v517, 3
        %v525 = vsel %vm524, %v399, 0.0
        %v526 = vadd.f32 %v519, %v512
        %v527 = vadd.f32 %v521, %v513
        %v528 = vadd.f32 %v523, %v514
        %v529 = vadd.f32 %v525, %v515
        %v530 = vmax.f32 %v526, 0.0
        %v531 = vmax.f32 %v527, 0.0
        %v532 = vmax.f32 %v528, 0.0
        %v533 = vmax.f32 %v529, 0.0
        %v534 = vpack.c.bf16 %v530, %v530
        %v535 = vpack.c.bf16 %v531, %v531
        %v536 = vpack.c.bf16 %v532, %v532
        %v537 = vpack.c.bf16 %v533, %v533
        %vm538 = vcmask 519168
        %539 = vst.msk [vmem:[%s341] sm:$0xf] %vm538, %v534
        %540 = vst.msk [vmem:[%s341 + $0x4] sm:$0xf] %vm538, %v535
        %541 = vst.msk [vmem:[%s341 + $0x8] sm:$0xf] %vm538, %v536
        %542 = vst.msk [vmem:[%s341 + $0xc] sm:$0xf] %vm538, %v537
        %s543 = sand.u32 %s226, 1
        %s544 = scalar_lea.sflag [#allocation3], %s543
        %s545 = sand.u32 %s226, 1
        %s546 = smul.addr %s545, 16
        %s547 = scalar_lea.vmem [#allocation2], %s546
        // Predicated region
        $region53: #{tpu_custom_call.1} parent=51 // pred_check
          %p548 = pneg %p236
        $region54: #{tpu_custom_call.1} parent=51 // pred_check_branch
          %550 = sbr.rel (%p548) target = $region56
        $region55: #{tpu_custom_call.1} parent=51 // pred_region
          %552 = vsyncadd %s544, 0
          %s553 = smul.addr %s26, 4
          %s554 = sadd.s32 %s27, %s553
          %s555 = smul.addr %s554, 4
          %s556 = scalar_lea.hbm %s8, %s555
          %s557 = sshll.u32 %s547, 4
          %s558 = int_to_ptr.vmem [resolvable:$true] %s557
          %s559 = sshll.u32 %s556, 4
          %s560 = int_to_ptr.hbm [resolvable:$true] %s559
          %565 = dma.vmem_to_hbm [thread:$0]  %s558, 256, %s560, %s544, 64, 64, 4
        $region56: #{tpu_custom_call.1} parent=51 // pred_fallthru
          _
      $region52: #{tpu_custom_call.1} parent=5 // pred_fallthru
        _
      %p566 = scmp.le.s32.totalorder 2, %s17
      // Predicated region
      $region57: #{tpu_custom_call.1} parent=5 // pred_check
        %p567 = pneg %p566
      $region58: #{tpu_custom_call.1} parent=5 // pred_check_branch
        %569 = sbr.rel (%p567) target = $region60
      $region59: #{tpu_custom_call.1} parent=5 // pred_region
        %s570 = ssub.s32 %s17, 2
        // Predicated region
        $region61: #{tpu_custom_call.1} parent=59 // pred_check
          %p571 = pneg %p242
        $region62: #{tpu_custom_call.1} parent=59 // pred_check_branch
          %573 = sbr.rel (%p571) target = $region64
        $region63: #{tpu_custom_call.1} parent=59 // pred_region
          %s574 = sand.u32 %s227, 1
          %s575 = scalar_lea.sflag [#allocation3], %s574
          %s576 = sand.u32 %s227, 1
          %s577 = smul.addr %s576, 16
          %s578 = scalar_lea.vmem [#allocation2], %s577
          %580 = dma.done %s575, 256
        $region64: #{tpu_custom_call.1} parent=59 // pred_fallthru
          _
      $region60: #{tpu_custom_call.1} parent=5 // pred_fallthru
        _
    $region6: #{tpu_custom_call.1} parent=1 // loop_footer
      %s21 = sadd.s32 1, %s17
    $region7: #{tpu_custom_call.1} parent=1 // loop_footer_branch
      %16 = sbr.rel target = $region3
    $region8: #{tpu_custom_call.1} parent=1 // loop_exit
      _
    %581 = vsyncpa [#allocation3], 1
    %s582 = scalar_lea.sflag [#allocation3], 1
    %583 = vsyncpa %s582, 1

</llo_original>
